<compile_context>
chip_gen: v7x
topology: tpu7x:2x2x1
jax: 0.10.0
libtpu: 0.0.40
codegen_flags: <defaults>
</compile_context>

<pallas_src>
import functools

import jax
import jax.numpy as jnp
from jax.experimental import pallas as pl
from jax.experimental.pallas import tpu as pltpu


def _nll_kernel(p_ref, t_ref, out_ref, acc_ref, se_ref, so_ref, *,
                rows_total, tr, nbi):
    c = pl.program_id(0)   # parallel (core) axis
    i = pl.program_id(1)   # batch-reduction axis

    @pl.when(i == 0)
    def _():
        acc_ref[...] = jnp.zeros_like(acc_ref)
        # One-hot lane-selection matrices: se[k, j] = (k == 2j), so[k, j] = (k == 2j+1).
        k = jax.lax.broadcasted_iota(jnp.int32, se_ref.shape, 0)
        j = jax.lax.broadcasted_iota(jnp.int32, se_ref.shape, 1)
        se_ref[...] = (k == 2 * j).astype(jnp.float32)
        so_ref[...] = (k == 2 * j + 1).astype(jnp.float32)

    p = p_ref[...]          # (TR, 256) f32, interleaved [mu0, ls0, mu1, ls1, ...]
    t = t_ref[...]          # (TR, 128) f32

    # Deinterleave on the MXU (idle otherwise); rows are independent so any
    # garbage in out-of-range rows stays in those rows and is masked below.
    mu = jnp.dot(p, se_ref[...], preferred_element_type=jnp.float32)  # (TR,128)
    ls = jnp.dot(p, so_ref[...], preferred_element_type=jnp.float32)  # (TR,128)

    diff = t - mu
    # Both 0.5 factors are folded into the final scale in the wrapper.
    val = ls + jnp.exp(-ls) * (diff * diff)

    # Mask rows beyond the true row count (ragged last block / clamped
    # overhang block of the 2-way split). jnp.where selects, so NaN/Inf from
    # garbage rows does not propagate.
    row = jax.lax.broadcasted_iota(jnp.int32, val.shape, 0) + (c * nbi + i) * tr
    val = jnp.where(row < rows_total, val, 0.0)

    # Vector accumulator: only a cross-sublane reduce per step; the cross-lane
    # reduce and scaling happen once in the wrapper finalize.
    acc_ref[...] += jnp.sum(val, axis=0, keepdims=True)   # (1, 128)

    @pl.when(i == nbi - 1)
    def _():
        out_ref[...] = acc_ref[...].reshape(out_ref.shape)


def nll_loss(preds: jax.Array, target: jax.Array, *,
             block_rows: int = 512, num_splits: int = 2) -> jax.Array:
    """NLL loss. preds: (B, 2) [mu, log_sigma_2], target: (B, 1). Returns (1,) f32."""
    assert preds.ndim == 2 and preds.shape[1] == 2
    assert target.ndim == 2 and target.shape[1] == 1
    B = preds.shape[0]
    assert target.shape[0] == B and B > 0

    LB = 128  # batch elements per row; preds row = 256 interleaved lanes

    # ---- layout: free contiguous reshapes only ----
    p = preds.astype(jnp.float32).reshape(-1)    # (2B,)
    t = target.astype(jnp.float32).reshape(-1)   # (B,)
    Bp = pl.cdiv(B, LB) * LB
    if Bp != B:
        # Only when B is not a multiple of 128: one small pad pass. Padded
        # zeros contribute exactly 0 loss (0 + exp(0) * 0 == 0).
        p = jnp.pad(p, (0, 2 * (Bp - B)))
        t = jnp.pad(t, (0, Bp - B))
    R = Bp // LB
    p2 = p.reshape(R, 2 * LB)   # (R, 256) interleaved (mu, ls) pairs
    t2 = t.reshape(R, LB)       # (R, 128)

    # ---- tiling ----
    block_rows = max(8, (int(block_rows) // 8) * 8)
    TR = R if R <= block_rows else block_rows          # full dim or multiple of 8
    NB = pl.cdiv(R, TR)                                # total row-blocks
    n_split = int(num_splits) if NB >= int(num_splits) else 1
    NBI = pl.cdiv(NB, n_split)                         # blocks per split/core

    def blk(c, i):
        # Clamp so a (possible) overhang block index never leaves the array;
        # its contribution is masked to zero in the kernel anyway.
        return (jnp.minimum(c * NBI + i, NB - 1), 0)

    kernel = functools.partial(_nll_kernel, rows_total=R, tr=TR, nbi=NBI)

    out = pl.pallas_call(
        kernel,
        out_shape=jax.ShapeDtypeStruct((n_split, 1, LB), jnp.float32),
        grid_spec=pltpu.PrefetchScalarGridSpec(
            num_scalar_prefetch=0,
            grid=(n_split, NBI),
            in_specs=[
                pl.BlockSpec((TR, 2 * LB), blk),   # preds rows (interleaved)
                pl.BlockSpec((TR, LB), blk),       # target rows
            ],
            out_specs=pl.BlockSpec((1, 1, LB), lambda c, i: (c, 0, 0)),
            scratch_shapes=[
                pltpu.VMEM((1, LB), jnp.float32),          # accumulator
                pltpu.VMEM((2 * LB, LB), jnp.float32),     # even-lane selector (mu)
                pltpu.VMEM((2 * LB, LB), jnp.float32),     # odd-lane selector (ls)
            ],
        ),
        compiler_params=pltpu.CompilerParams(
            dimension_semantics=("parallel", "arbitrary"),
        ),
    )(p2, t2)

    # Tiny finalize: combine per-core (1,128) partials, fold 0.5 and 1/B.
    return (jnp.sum(out) * (0.5 / float(B))).reshape((1,))


def _nll_reference(preds, target):
    mu = preds[:, 0:1].astype(jnp.float32)
    ls = preds[:, 1:2].astype(jnp.float32)
    loss = 0.5 * ls + 0.5 * jnp.exp(-ls) * (target.astype(jnp.float32) - mu) ** 2
    return jnp.mean(loss, axis=0)


if __name__ == "__main__":
    key = jax.random.PRNGKey(0)
    k1, k2, k3, k4, k5, k6 = jax.random.split(key, 6)

    # Case 1: module-spec small shape (B=8). Pad path, single block, no split.
    B = 8
    preds = jax.random.normal(k1, (B, 2), dtype=jnp.float32)
    target = jax.random.normal(k2, (B, 1), dtype=jnp.float32)
    out = jax.block_until_ready(nll_loss(preds, target))
    ref = _nll_reference(preds, target)
    assert out.shape == (1,)
    assert jnp.allclose(out, ref, rtol=1e-5, atol=1e-5), (out, ref)

    # Case 2: B % 128 == 0, multi-block, 2-way split, ragged last block and a
    # clamped overhang block (R=23 rows, TR=8 -> NB=3, NBI=2).
    B2 = 128 * 23
    preds2 = jax.random.normal(k3, (B2, 2), dtype=jnp.float32)
    target2 = jax.random.normal(k4, (B2, 1), dtype=jnp.float32)
    out2 = jax.block_until_ready(nll_loss(preds2, target2, block_rows=8))
    ref2 = _nll_reference(preds2, target2)
    assert out2.shape == (1,)
    assert jnp.allclose(out2, ref2, rtol=1e-5, atol=1e-5), (out2, ref2)

    # Case 3: batch not a multiple of 128 (small pad path), multi-row block.
    B3 = 300
    preds3 = jax.random.normal(k5, (B3, 2), dtype=jnp.float32)
    target3 = jax.random.normal(k6, (B3, 1), dtype=jnp.float32)
    out3 = jax.block_until_ready(nll_loss(preds3, target3))
    ref3 = _nll_reference(preds3, target3)
    assert out3.shape == (1,)
    assert jnp.allclose(out3, ref3, rtol=1e-5, atol=1e-5), (out3, ref3)

    print("KERNEL_OK")
</pallas_src>

<mosaic_0001>
module attributes {stable_mosaic.version = 11 : i64} {
  func.func @_nll_kernel(%arg0: i32, %arg1: i32, %arg2: memref<1x256xf32, #tpu.memory_space<vmem>>, %arg3: memref<1x128xf32, #tpu.memory_space<vmem>>, %arg4: memref<1x1x128xf32, #tpu.memory_space<vmem>>, %arg5: memref<1x128xf32, #tpu.memory_space<vmem>>, %arg6: memref<256x128xf32, #tpu.memory_space<vmem>>, %arg7: memref<256x128xf32, #tpu.memory_space<vmem>>) attributes {dimension_semantics = [#tpu.dimension_semantics<parallel>, #tpu.dimension_semantics<arbitrary>], iteration_bounds = array<i64: 1, 1>, scalar_prefetch = 0 : i64, scratch_operands = 3 : i64, tpu.core_type = #tpu.core_type<tc>, window_params = [{transform_indices = @transform_0, window_bounds = array<i64: 1, 256>}, {transform_indices = @transform_1, window_bounds = array<i64: 1, 128>}, {transform_indices = @transform_2, window_bounds = array<i64: 1, 1, 128>}]} {
    %c0_i32 = arith.constant 0 : i32
    %0 = arith.cmpi eq, %arg1, %c0_i32 : i32
    %1 = arith.extui %0 : i1 to i32
    %c0_i32_0 = arith.constant 0 : i32
    %2 = arith.cmpi ne, %1, %c0_i32_0 : i32
    scf.if %2 {
      %cst_20 = arith.constant 0.000000e+00 : f32
      %34 = vector.broadcast %cst_20 : f32 to vector<1x128xf32>
      %c0_21 = arith.constant 0 : index
      %c0_22 = arith.constant 0 : index
      %35 = vector.load %arg5[%c0_21, %c0_22] : memref<1x128xf32, #tpu.memory_space<vmem>>, vector<1x128xf32>
      tpu.vector_store %arg5[%c0_21, %c0_22], %34 {strides = array<i32>} : memref<1x128xf32, #tpu.memory_space<vmem>>, vector<1x128xf32>,
      %36 = tpu.iota {dimensions = array<i32: 0>} : vector<256x128xi32>
      %37 = tpu.iota {dimensions = array<i32: 1>} : vector<256x128xi32>
      %c2_i32 = arith.constant 2 : i32
      %38 = vector.broadcast %c2_i32 : i32 to vector<256x128xi32>
      %39 = arith.muli %38, %37 : vector<256x128xi32>
      %40 = arith.cmpi eq, %36, %39 : vector<256x128xi32>
      %41 = arith.extui %40 : vector<256x128xi1> to vector<256x128xi32>
      %42 = arith.sitofp %41 : vector<256x128xi32> to vector<256x128xf32>
      %c0_23 = arith.constant 0 : index
      %c0_24 = arith.constant 0 : index
      %43 = vector.load %arg6[%c0_23, %c0_24] : memref<256x128xf32, #tpu.memory_space<vmem>>, vector<256x128xf32>
      tpu.vector_store %arg6[%c0_23, %c0_24], %42 {strides = array<i32>} : memref<256x128xf32, #tpu.memory_space<vmem>>, vector<256x128xf32>,
      %c2_i32_25 = arith.constant 2 : i32
      %44 = vector.broadcast %c2_i32_25 : i32 to vector<256x128xi32>
      %45 = arith.muli %44, %37 : vector<256x128xi32>
      %c1_i32_26 = arith.constant 1 : i32
      %46 = vector.broadcast %c1_i32_26 : i32 to vector<256x128xi32>
      %47 = arith.addi %45, %46 : vector<256x128xi32>
      %48 = arith.cmpi eq, %36, %47 : vector<256x128xi32>
      %49 = arith.extui %48 : vector<256x128xi1> to vector<256x128xi32>
      %50 = arith.sitofp %49 : vector<256x128xi32> to vector<256x128xf32>
      %c0_27 = arith.constant 0 : index
      %c0_28 = arith.constant 0 : index
      %51 = vector.load %arg7[%c0_27, %c0_28] : memref<256x128xf32, #tpu.memory_space<vmem>>, vector<256x128xf32>
      tpu.vector_store %arg7[%c0_27, %c0_28], %50 {strides = array<i32>} : memref<256x128xf32, #tpu.memory_space<vmem>>, vector<256x128xf32>,
    } else {
    }
    %c0 = arith.constant 0 : index
    %c0_1 = arith.constant 0 : index
    %3 = vector.load %arg2[%c0, %c0_1] : memref<1x256xf32, #tpu.memory_space<vmem>>, vector<1x256xf32>
    %c0_2 = arith.constant 0 : index
    %c0_3 = arith.constant 0 : index
    %4 = vector.load %arg3[%c0_2, %c0_3] : memref<1x128xf32, #tpu.memory_space<vmem>>, vector<1x128xf32>
    %c0_4 = arith.constant 0 : index
    %c0_5 = arith.constant 0 : index
    %5 = vector.load %arg6[%c0_4, %c0_5] : memref<256x128xf32, #tpu.memory_space<vmem>>, vector<256x128xf32>
    %cst = arith.constant dense<0.000000e+00> : vector<1x128xf32>
    %6 = tpu.matmul %3, %5, %cst {dimension_numbers = #tpu.dot_dimension_numbers<[1], [0], [0], [1], [0, 0, 1, 1], [], []>} : vector<1x256xf32>, vector<256x128xf32>, vector<1x128xf32> -> vector<1x128xf32>
    %c0_6 = arith.constant 0 : index
    %c0_7 = arith.constant 0 : index
    %7 = vector.load %arg7[%c0_6, %c0_7] : memref<256x128xf32, #tpu.memory_space<vmem>>, vector<256x128xf32>
    %cst_8 = arith.constant dense<0.000000e+00> : vector<1x128xf32>
    %8 = tpu.matmul %3, %7, %cst_8 {dimension_numbers = #tpu.dot_dimension_numbers<[1], [0], [0], [1], [0, 0, 1, 1], [], []>} : vector<1x256xf32>, vector<256x128xf32>, vector<1x128xf32> -> vector<1x128xf32>
    %9 = arith.subf %4, %6 : vector<1x128xf32>
    %cst_9 = arith.constant 0.000000e+00 : f32
    %10 = vector.broadcast %cst_9 : f32 to vector<1x128xf32>
    %11 = arith.subf %10, %8 : vector<1x128xf32>
    %12 = math.exp %11 : vector<1x128xf32>
    %13 = arith.mulf %9, %9 : vector<1x128xf32>
    %14 = arith.mulf %12, %13 : vector<1x128xf32>
    %15 = arith.addf %8, %14 : vector<1x128xf32>
    %16 = tpu.iota {dimensions = array<i32: 0>} : vector<1x128xi32>
    %c1_i32 = arith.constant 1 : i32
    %17 = arith.muli %arg0, %c1_i32 : i32
    %18 = arith.addi %17, %arg1 : i32
    %c1_i32_10 = arith.constant 1 : i32
    %19 = arith.muli %18, %c1_i32_10 : i32
    %20 = vector.broadcast %19 : i32 to vector<1x128xi32>
    %21 = arith.addi %16, %20 : vector<1x128xi32>
    %c1_i32_11 = arith.constant 1 : i32
    %22 = vector.broadcast %c1_i32_11 : i32 to vector<1x128xi32>
    %23 = arith.cmpi slt, %21, %22 : vector<1x128xi32>
    %cst_12 = arith.constant 0.000000e+00 : f32
    %24 = vector.broadcast %cst_12 : f32 to vector<1x128xf32>
    %25 = arith.select %23, %15, %24 : vector<1x128xi1>, vector<1x128xf32>
    %c0_13 = arith.constant 0 : index
    %c0_14 = arith.constant 0 : index
    %26 = vector.load %arg5[%c0_13, %c0_14] : memref<1x128xf32, #tpu.memory_space<vmem>>, vector<1x128xf32>
    %cst_15 = arith.constant dense<0.000000e+00> : vector<128xf32>
    %27 = vector.multi_reduction <add>, %25, %cst_15 [0] : vector<1x128xf32> to vector<128xf32>
    %28 = vector.shape_cast %27 : vector<128xf32> to vector<1x128xf32>
    %29 = arith.addf %26, %28 : vector<1x128xf32>
    %c0_16 = arith.constant 0 : index
    %c0_17 = arith.constant 0 : index
    %30 = vector.load %arg5[%c0_16, %c0_17] : memref<1x128xf32, #tpu.memory_space<vmem>>, vector<1x128xf32>
    tpu.vector_store %arg5[%c0_16, %c0_17], %29 {strides = array<i32>} : memref<1x128xf32, #tpu.memory_space<vmem>>, vector<1x128xf32>,
    %c0_i32_18 = arith.constant 0 : i32
    %31 = arith.cmpi eq, %arg1, %c0_i32_18 : i32
    %32 = arith.extui %31 : i1 to i32
    %c0_i32_19 = arith.constant 0 : i32
    %33 = arith.cmpi ne, %32, %c0_i32_19 : i32
    scf.if %33 {
      %c0_20 = arith.constant 0 : index
      %c0_21 = arith.constant 0 : index
      %34 = vector.load %arg5[%c0_20, %c0_21] : memref<1x128xf32, #tpu.memory_space<vmem>>, vector<1x128xf32>
      %35 = vector.shape_cast %34 : vector<1x128xf32> to vector<1x1x128xf32>
      %c0_22 = arith.constant 0 : index
      %c0_23 = arith.constant 0 : index
      %c0_24 = arith.constant 0 : index
      %36 = vector.load %arg4[%c0_22, %c0_23, %c0_24] : memref<1x1x128xf32, #tpu.memory_space<vmem>>, vector<1x1x128xf32>
      tpu.vector_store %arg4[%c0_22, %c0_23, %c0_24], %35 {strides = array<i32>} : memref<1x1x128xf32, #tpu.memory_space<vmem>>, vector<1x1x128xf32>,
    } else {
    }
    return
  }
  func.func @transform_0(%arg0: i32, %arg1: i32) -> (i32, i32) {
    %c1_i32 = arith.constant 1 : i32
    %0 = arith.muli %arg0, %c1_i32 : i32
    %1 = arith.addi %0, %arg1 : i32
    %c0_i32 = arith.constant 0 : i32
    %2 = arith.minsi %1, %c0_i32 : i32
    %c0_i32_0 = arith.constant 0 : i32
    %c0_i32_1 = arith.constant 0 : i32
    return %2, %c0_i32_0 : i32, i32
  }
  func.func @transform_1(%arg0: i32, %arg1: i32) -> (i32, i32) {
    %c1_i32 = arith.constant 1 : i32
    %0 = arith.muli %arg0, %c1_i32 : i32
    %1 = arith.addi %0, %arg1 : i32
    %c0_i32 = arith.constant 0 : i32
    %2 = arith.minsi %1, %c0_i32 : i32
    %c0_i32_0 = arith.constant 0 : i32
    %c0_i32_1 = arith.constant 0 : i32
    return %2, %c0_i32_0 : i32, i32
  }
  func.func @transform_2(%arg0: i32, %arg1: i32) -> (i32, i32, i32) {
    %c0_i32 = arith.constant 0 : i32
    %c0_i32_0 = arith.constant 0 : i32
    %c0_i32_1 = arith.constant 0 : i32
    return %arg0, %c0_i32, %c0_i32_0 : i32, i32, i32
  }
}

</mosaic_0001>

<llo_original>
// kernel: tpu_custom_call.1
$region0: #{tpu_custom_call.1}
  #allocation0 [shape = 'u32[]', space=smem, size = 0x4, offset = 0x4, fixed_abs, tag = 'smem constant byte address 0x4 - core index']
  #allocation1 [shape = 'u32[144,128]{1,0:T(1,128)}', space=vmem, size = 0x12000, scoped, tag = 'internal scratch']
  #allocation2 [shape = 'f32[1,128]{1,0:T(1,128)}', space=vmem, size = 0x200, scoped, tag = 'scratch operand']
  #allocation3 [shape = 'f32[256,128]{1,0:T(8,128)}', space=vmem, size = 0x20000, scoped, tag = 'scratch operand']
  #allocation4 [shape = 'f32[256,128]{1,0:T(8,128)}', space=vmem, size = 0x20000, scoped, tag = 'scratch operand']
  %s0 = inlined_call_operand.hbm [shape: f32[1,256], index: 0, kind: input, shape index: {}]
  %s1 = inlined_call_operand.vmem [shape: f32[1,128], index: 1, kind: input, shape index: {}]
  %s2 = inlined_call_operand.hbm [shape: f32[1,1,128], index: 2, kind: output, shape index: {}]
  %s3 = sld [smem:[#allocation0]]
  $region30: #{tpu_custom_call.1} parent=0
    _
  %s5 = ssub.s32 1, %s3
  %s6 = scalar_select 0, %s5, %s3
  $region1: #{tpu_custom_call.1} parent=0
    #allocation5 [shape = 'u8[1024]{0}', space=vmem, size = 0x400, scoped, tag = 'input window, operand 0, single buffered']
    #allocation6 [shape = 's32[1]{0}', space=sflag, size = 0x4, scoped, tag = 'scoped memory for tpu_custom_call.1']
    #allocation7 [shape = 's32[1]{0}', space=sflag, size = 0x4, scoped, tag = 'scoped memory for tpu_custom_call.1']
    #allocation8 [shape = 'u8[512]{0}', space=vmem, size = 0x400, scoped, tag = 'output window, operand 0, single buffered']
    %7 = vsyncpa [#allocation6], 0
    %8 = vsyncpa [#allocation7], 0
    // Predicated region
    $region2: #{tpu_custom_call.1} parent=1 // pred_check
      _
    $region3: #{tpu_custom_call.1} parent=1 // pred_check_branch
      %10 = sbr.rel (0) target = $region5
    $region4: #{tpu_custom_call.1} parent=1 // pred_region
      %s11 = sadd.s32 0, 0
      %p12 = scmp.lt.s32.totalorder %s11, 0
      %s13 = scalar_select %p12, %s11, 0
      %s15 = ssub.s32 32, 32
      %16 = vsyncadd [#allocation6], %s15
      %s17 = smul.addr %s13, 2
      %s18 = smul.addr %s17, 16
      %s19 = scalar_lea.hbm %s0, %s18
      %s21 = sshll.u32 [#allocation5], 4
      %s22 = int_to_ptr.vmem [resolvable:$true] %s21
      %24 = dma.hbm_to_vmem [thread:$0]  %s19, 32, %s22, [#allocation6]
    $region5: #{tpu_custom_call.1} parent=1 // pred_fallthru
      _
    // Predicated region
    $region6: #{tpu_custom_call.1} parent=1 // pred_check
      _
    $region7: #{tpu_custom_call.1} parent=1 // pred_check_branch
      %26 = sbr.rel (0) target = $region9
    $region8: #{tpu_custom_call.1} parent=1 // pred_region
      %s27 = sadd.s32 0, 0
      %p28 = scmp.lt.s32.totalorder %s27, 0
      %s29 = scalar_select %p28, %s27, 0
      %p30 = scmp.lt.s32.totalorder %s29, 0
      %s31 = scalar_select %p30, %s29, 0
      %s32 = scalar_lea.vmem %s1, %s31
      %s33 = sadd.s32 0, 0
      %p34 = scmp.lt.s32.totalorder %s33, 0
      %s35 = scalar_select %p34, %s33, 0
    $region9: #{tpu_custom_call.1} parent=1 // pred_fallthru
      _
    // Predicated region
    $region10: #{tpu_custom_call.1} parent=1 // pred_check
      _
    $region11: #{tpu_custom_call.1} parent=1 // pred_check_branch
      %37 = sbr.rel (0) target = $region13
    $region12: #{tpu_custom_call.1} parent=1 // pred_region
      %38 = dma.done [#allocation6], 32
    $region13: #{tpu_custom_call.1} parent=1 // pred_fallthru
      _
    %s39 = sadd.s32 0, 0
    %p40 = scmp.lt.s32.totalorder %s39, 0
    %s41 = scalar_select %p40, %s39, 0
    %p42 = scmp.lt.s32.totalorder %s41, 0
    %s43 = scalar_select %p42, %s41, 0
    %s44 = scalar_lea.vmem %s1, %s43
    %s45 = sadd.s32 0, 0
    %p46 = scmp.lt.s32.totalorder %s45, 0
    %s47 = scalar_select %p46, %s45, 0
    %s48 = sadd.s32 0, 0
    %p49 = scmp.lt.s32.totalorder %s48, 0
    %s50 = scalar_select %p49, %s48, 0
    %p51 = scmp.lt.s32.totalorder %s50, 0
    %s52 = scalar_select %p51, %s50, 0
    %s53 = scalar_lea.vmem %s1, %s52
    %s54 = sadd.s32 0, 0
    %p55 = scmp.lt.s32.totalorder %s54, 0
    %s56 = scalar_select %p55, %s54, 0
    %p57 = scmp.eq.s32.totalorder 0, 0
    // Predicated region
    $region14: #{tpu_custom_call.1} parent=1 // pred_check
      %p58 = pneg %p57
    $region15: #{tpu_custom_call.1} parent=1 // pred_check_branch
      %60 = sbr.rel (%p58) target = $region17
    $region16: #{tpu_custom_call.1} parent=1 // pred_region
      %61 = vst [vmem:[#allocation2] sm:$0x1] 0.0
      %v62 = vlaneseq
      %v63 = vshrl.u32 %v62, 7
      %v64 = vadd.s32 %v63, 8
      %v65 = vadd.s32 %v63, 16
      %v66 = vadd.s32 %v63, 24
      %v67 = vadd.s32 %v63, 32
      %v68 = vadd.s32 %v63, 40
      %v69 = vadd.s32 %v63, 48
      %v70 = vadd.s32 %v63, 56
      %v71 = vadd.s32 %v63, 64
      %v72 = vadd.s32 %v63, 72
      %v73 = vadd.s32 %v63, 80
      %v74 = vadd.s32 %v63, 88
      %v75 = vadd.s32 %v63, 96
      %v76 = vadd.s32 %v63, 104
      %v77 = vadd.s32 %v63, 112
      %v78 = vadd.s32 %v63, 120
      %v79 = vadd.s32 %v63, 128
      %v80 = vadd.s32 %v63, 136
      %v81 = vadd.s32 %v63, 144
      %v82 = vadd.s32 %v63, 152
      %v83 = vadd.s32 %v63, 160
      %v84 = vadd.s32 %v63, 168
      %v85 = vadd.s32 %v63, 176
      %v86 = vadd.s32 %v63, 184
      %v87 = vadd.s32 %v63, 192
      %v88 = vadd.s32 %v63, 200
      %v89 = vadd.s32 %v63, 208
      %v90 = vadd.s32 %v63, 216
      %v91 = vadd.s32 %v63, 224
      %v92 = vadd.s32 %v63, 232
      %v93 = vadd.s32 %v63, 240
      %v94 = vadd.s32 %v63, 248
      %v95 = vlaneseq
      %v96 = vand.u32 %v95, 127
      %v97 = vmul.u32 %v96, 2
      %vm98 = vcmp.eq.s32.totalorder %v63, %v97
      %vm99 = vcmp.eq.s32.totalorder %v64, %v97
      %vm100 = vcmp.eq.s32.totalorder %v65, %v97
      %vm101 = vcmp.eq.s32.totalorder %v66, %v97
      %vm102 = vcmp.eq.s32.totalorder %v67, %v97
      %vm103 = vcmp.eq.s32.totalorder %v68, %v97
      %vm104 = vcmp.eq.s32.totalorder %v69, %v97
      %vm105 = vcmp.eq.s32.totalorder %v70, %v97
      %vm106 = vcmp.eq.s32.totalorder %v71, %v97
      %vm107 = vcmp.eq.s32.totalorder %v72, %v97
      %vm108 = vcmp.eq.s32.totalorder %v73, %v97
      %vm109 = vcmp.eq.s32.totalorder %v74, %v97
      %vm110 = vcmp.eq.s32.totalorder %v75, %v97
      %vm111 = vcmp.eq.s32.totalorder %v76, %v97
      %vm112 = vcmp.eq.s32.totalorder %v77, %v97
      %vm113 = vcmp.eq.s32.totalorder %v78, %v97
      %vm114 = vcmp.eq.s32.totalorder %v79, %v97
      %vm115 = vcmp.eq.s32.totalorder %v80, %v97
      %vm116 = vcmp.eq.s32.totalorder %v81, %v97
      %vm117 = vcmp.eq.s32.totalorder %v82, %v97
      %vm118 = vcmp.eq.s32.totalorder %v83, %v97
      %vm119 = vcmp.eq.s32.totalorder %v84, %v97
      %vm120 = vcmp.eq.s32.totalorder %v85, %v97
      %vm121 = vcmp.eq.s32.totalorder %v86, %v97
      %vm122 = vcmp.eq.s32.totalorder %v87, %v97
      %vm123 = vcmp.eq.s32.totalorder %v88, %v97
      %vm124 = vcmp.eq.s32.totalorder %v89, %v97
      %vm125 = vcmp.eq.s32.totalorder %v90, %v97
      %vm126 = vcmp.eq.s32.totalorder %v91, %v97
      %vm127 = vcmp.eq.s32.totalorder %v92, %v97
      %vm128 = vcmp.eq.s32.totalorder %v93, %v97
      %vm129 = vcmp.eq.s32.totalorder %v94, %v97
      %v130 = vsel %vm98, 1, 0
      %v131 = vsel %vm99, 1, 0
      %v132 = vsel %vm100, 1, 0
      %v133 = vsel %vm101, 1, 0
      %v134 = vsel %vm102, 1, 0
      %v135 = vsel %vm103, 1, 0
      %v136 = vsel %vm104, 1, 0
      %v137 = vsel %vm105, 1, 0
      %v138 = vsel %vm106, 1, 0
      %v139 = vsel %vm107, 1, 0
      %v140 = vsel %vm108, 1, 0
      %v141 = vsel %vm109, 1, 0
      %v142 = vsel %vm110, 1, 0
      %v143 = vsel %vm111, 1, 0
      %v144 = vsel %vm112, 1, 0
      %v145 = vsel %vm113, 1, 0
      %v146 = vsel %vm114, 1, 0
      %v147 = vsel %vm115, 1, 0
      %v148 = vsel %vm116, 1, 0
      %v149 = vsel %vm117, 1, 0
      %v150 = vsel %vm118, 1, 0
      %v151 = vsel %vm119, 1, 0
      %v152 = vsel %vm120, 1, 0
      %v153 = vsel %vm121, 1, 0
      %v154 = vsel %vm122, 1, 0
      %v155 = vsel %vm123, 1, 0
      %v156 = vsel %vm124, 1, 0
      %v157 = vsel %vm125, 1, 0
      %v158 = vsel %vm126, 1, 0
      %v159 = vsel %vm127, 1, 0
      %v160 = vsel %vm128, 1, 0
      %v161 = vsel %vm129, 1, 0
      %v162 = vcvt.s32.f32 %v130
      %v163 = vcvt.s32.f32 %v131
      %v164 = vcvt.s32.f32 %v132
      %v165 = vcvt.s32.f32 %v133
      %v166 = vcvt.s32.f32 %v134
      %v167 = vcvt.s32.f32 %v135
      %v168 = vcvt.s32.f32 %v136
      %v169 = vcvt.s32.f32 %v137
      %v170 = vcvt.s32.f32 %v138
      %v171 = vcvt.s32.f32 %v139
      %v172 = vcvt.s32.f32 %v140
      %v173 = vcvt.s32.f32 %v141
      %v174 = vcvt.s32.f32 %v142
      %v175 = vcvt.s32.f32 %v143
      %v176 = vcvt.s32.f32 %v144
      %v177 = vcvt.s32.f32 %v145
      %v178 = vcvt.s32.f32 %v146
      %v179 = vcvt.s32.f32 %v147
      %v180 = vcvt.s32.f32 %v148
      %v181 = vcvt.s32.f32 %v149
      %v182 = vcvt.s32.f32 %v150
      %v183 = vcvt.s32.f32 %v151
      %v184 = vcvt.s32.f32 %v152
      %v185 = vcvt.s32.f32 %v153
      %v186 = vcvt.s32.f32 %v154
      %v187 = vcvt.s32.f32 %v155
      %v188 = vcvt.s32.f32 %v156
      %v189 = vcvt.s32.f32 %v157
      %v190 = vcvt.s32.f32 %v158
      %v191 = vcvt.s32.f32 %v159
      %v192 = vcvt.s32.f32 %v160
      %v193 = vcvt.s32.f32 %v161
      %194 = vst [vmem:[#allocation3] sm:$0xff] %v162
      %195 = vst [vmem:[#allocation3 + $0x8] sm:$0xff] %v163
      %196 = vst [vmem:[#allocation3 + $0x10] sm:$0xff] %v164
      %197 = vst [vmem:[#allocation3 + $0x18] sm:$0xff] %v165
      %198 = vst [vmem:[#allocation3 + $0x20] sm:$0xff] %v166
      %199 = vst [vmem:[#allocation3 + $0x28] sm:$0xff] %v167
      %200 = vst [vmem:[#allocation3 + $0x30] sm:$0xff] %v168
      %201 = vst [vmem:[#allocation3 + $0x38] sm:$0xff] %v169
      %202 = vst [vmem:[#allocation3 + $0x40] sm:$0xff] %v170
      %203 = vst [vmem:[#allocation3 + $0x48] sm:$0xff] %v171
      %204 = vst [vmem:[#allocation3 + $0x50] sm:$0xff] %v172
      %205 = vst [vmem:[#allocation3 + $0x58] sm:$0xff] %v173
      %206 = vst [vmem:[#allocation3 + $0x60] sm:$0xff] %v174
      %207 = vst [vmem:[#allocation3 + $0x68] sm:$0xff] %v175
      %208 = vst [vmem:[#allocation3 + $0x70] sm:$0xff] %v176
      %209 = vst [vmem:[#allocation3 + $0x78] sm:$0xff] %v177
      %210 = vst [vmem:[#allocation3 + $0x80] sm:$0xff] %v178
      %211 = vst [vmem:[#allocation3 + $0x88] sm:$0xff] %v179
      %212 = vst [vmem:[#allocation3 + $0x90] sm:$0xff] %v180
      %213 = vst [vmem:[#allocation3 + $0x98] sm:$0xff] %v181
      %214 = vst [vmem:[#allocation3 + $0xa0] sm:$0xff] %v182
      %215 = vst [vmem:[#allocation3 + $0xa8] sm:$0xff] %v183
      %216 = vst [vmem:[#allocation3 + $0xb0] sm:$0xff] %v184
      %217 = vst [vmem:[#allocation3 + $0xb8] sm:$0xff] %v185
      %218 = vst [vmem:[#allocation3 + $0xc0] sm:$0xff] %v186
      %219 = vst [vmem:[#allocation3 + $0xc8] sm:$0xff] %v187
      %220 = vst [vmem:[#allocation3 + $0xd0] sm:$0xff] %v188
      %221 = vst [vmem:[#allocation3 + $0xd8] sm:$0xff] %v189
      %222 = vst [vmem:[#allocation3 + $0xe0] sm:$0xff] %v190
      %223 = vst [vmem:[#allocation3 + $0xe8] sm:$0xff] %v191
      %224 = vst [vmem:[#allocation3 + $0xf0] sm:$0xff] %v192
      %225 = vst [vmem:[#allocation3 + $0xf8] sm:$0xff] %v193
      %v226 = vadd.s32 %v97, 1
      %vm227 = vcmp.eq.s32.totalorder %v63, %v226
      %vm228 = vcmp.eq.s32.totalorder %v64, %v226
      %vm229 = vcmp.eq.s32.totalorder %v65, %v226
      %vm230 = vcmp.eq.s32.totalorder %v66, %v226
      %vm231 = vcmp.eq.s32.totalorder %v67, %v226
      %vm232 = vcmp.eq.s32.totalorder %v68, %v226
      %vm233 = vcmp.eq.s32.totalorder %v69, %v226
      %vm234 = vcmp.eq.s32.totalorder %v70, %v226
      %vm235 = vcmp.eq.s32.totalorder %v71, %v226
      %vm236 = vcmp.eq.s32.totalorder %v72, %v226
      %vm237 = vcmp.eq.s32.totalorder %v73, %v226
      %vm238 = vcmp.eq.s32.totalorder %v74, %v226
      %vm239 = vcmp.eq.s32.totalorder %v75, %v226
      %vm240 = vcmp.eq.s32.totalorder %v76, %v226
      %vm241 = vcmp.eq.s32.totalorder %v77, %v226
      %vm242 = vcmp.eq.s32.totalorder %v78, %v226
      %vm243 = vcmp.eq.s32.totalorder %v79, %v226
      %vm244 = vcmp.eq.s32.totalorder %v80, %v226
      %vm245 = vcmp.eq.s32.totalorder %v81, %v226
      %vm246 = vcmp.eq.s32.totalorder %v82, %v226
      %vm247 = vcmp.eq.s32.totalorder %v83, %v226
      %vm248 = vcmp.eq.s32.totalorder %v84, %v226
      %vm249 = vcmp.eq.s32.totalorder %v85, %v226
      %vm250 = vcmp.eq.s32.totalorder %v86, %v226
      %vm251 = vcmp.eq.s32.totalorder %v87, %v226
      %vm252 = vcmp.eq.s32.totalorder %v88, %v226
      %vm253 = vcmp.eq.s32.totalorder %v89, %v226
      %vm254 = vcmp.eq.s32.totalorder %v90, %v226
      %vm255 = vcmp.eq.s32.totalorder %v91, %v226
      %vm256 = vcmp.eq.s32.totalorder %v92, %v226
      %vm257 = vcmp.eq.s32.totalorder %v93, %v226
      %vm258 = vcmp.eq.s32.totalorder %v94, %v226
      %v259 = vsel %vm227, 1, 0
      %v260 = vsel %vm228, 1, 0
      %v261 = vsel %vm229, 1, 0
      %v262 = vsel %vm230, 1, 0
      %v263 = vsel %vm231, 1, 0
      %v264 = vsel %vm232, 1, 0
      %v265 = vsel %vm233, 1, 0
      %v266 = vsel %vm234, 1, 0
      %v267 = vsel %vm235, 1, 0
      %v268 = vsel %vm236, 1, 0
      %v269 = vsel %vm237, 1, 0
      %v270 = vsel %vm238, 1, 0
      %v271 = vsel %vm239, 1, 0
      %v272 = vsel %vm240, 1, 0
      %v273 = vsel %vm241, 1, 0
      %v274 = vsel %vm242, 1, 0
      %v275 = vsel %vm243, 1, 0
      %v276 = vsel %vm244, 1, 0
      %v277 = vsel %vm245, 1, 0
      %v278 = vsel %vm246, 1, 0
      %v279 = vsel %vm247, 1, 0
      %v280 = vsel %vm248, 1, 0
      %v281 = vsel %vm249, 1, 0
      %v282 = vsel %vm250, 1, 0
      %v283 = vsel %vm251, 1, 0
      %v284 = vsel %vm252, 1, 0
      %v285 = vsel %vm253, 1, 0
      %v286 = vsel %vm254, 1, 0
      %v287 = vsel %vm255, 1, 0
      %v288 = vsel %vm256, 1, 0
      %v289 = vsel %vm257, 1, 0
      %v290 = vsel %vm258, 1, 0
      %v291 = vcvt.s32.f32 %v259
      %v292 = vcvt.s32.f32 %v260
      %v293 = vcvt.s32.f32 %v261
      %v294 = vcvt.s32.f32 %v262
      %v295 = vcvt.s32.f32 %v263
      %v296 = vcvt.s32.f32 %v264
      %v297 = vcvt.s32.f32 %v265
      %v298 = vcvt.s32.f32 %v266
      %v299 = vcvt.s32.f32 %v267
      %v300 = vcvt.s32.f32 %v268
      %v301 = vcvt.s32.f32 %v269
      %v302 = vcvt.s32.f32 %v270
      %v303 = vcvt.s32.f32 %v271
      %v304 = vcvt.s32.f32 %v272
      %v305 = vcvt.s32.f32 %v273
      %v306 = vcvt.s32.f32 %v274
      %v307 = vcvt.s32.f32 %v275
      %v308 = vcvt.s32.f32 %v276
      %v309 = vcvt.s32.f32 %v277
      %v310 = vcvt.s32.f32 %v278
      %v311 = vcvt.s32.f32 %v279
      %v312 = vcvt.s32.f32 %v280
      %v313 = vcvt.s32.f32 %v281
      %v314 = vcvt.s32.f32 %v282
      %v315 = vcvt.s32.f32 %v283
      %v316 = vcvt.s32.f32 %v284
      %v317 = vcvt.s32.f32 %v285
      %v318 = vcvt.s32.f32 %v286
      %v319 = vcvt.s32.f32 %v287
      %v320 = vcvt.s32.f32 %v288
      %v321 = vcvt.s32.f32 %v289
      %v322 = vcvt.s32.f32 %v290
      %323 = vst [vmem:[#allocation4] sm:$0xff] %v291
      %324 = vst [vmem:[#allocation4 + $0x8] sm:$0xff] %v292
      %325 = vst [vmem:[#allocation4 + $0x10] sm:$0xff] %v293
      %326 = vst [vmem:[#allocation4 + $0x18] sm:$0xff] %v294
      %327 = vst [vmem:[#allocation4 + $0x20] sm:$0xff] %v295
      %328 = vst [vmem:[#allocation4 + $0x28] sm:$0xff] %v296
      %329 = vst [vmem:[#allocation4 + $0x30] sm:$0xff] %v297
      %330 = vst [vmem:[#allocation4 + $0x38] sm:$0xff] %v298
      %331 = vst [vmem:[#allocation4 + $0x40] sm:$0xff] %v299
      %332 = vst [vmem:[#allocation4 + $0x48] sm:$0xff] %v300
      %333 = vst [vmem:[#allocation4 + $0x50] sm:$0xff] %v301
      %334 = vst [vmem:[#allocation4 + $0x58] sm:$0xff] %v302
      %335 = vst [vmem:[#allocation4 + $0x60] sm:$0xff] %v303
      %336 = vst [vmem:[#allocation4 + $0x68] sm:$0xff] %v304
      %337 = vst [vmem:[#allocation4 + $0x70] sm:$0xff] %v305
      %338 = vst [vmem:[#allocation4 + $0x78] sm:$0xff] %v306
      %339 = vst [vmem:[#allocation4 + $0x80] sm:$0xff] %v307
      %340 = vst [vmem:[#allocation4 + $0x88] sm:$0xff] %v308
      %341 = vst [vmem:[#allocation4 + $0x90] sm:$0xff] %v309
      %342 = vst [vmem:[#allocation4 + $0x98] sm:$0xff] %v310
      %343 = vst [vmem:[#allocation4 + $0xa0] sm:$0xff] %v311
      %344 = vst [vmem:[#allocation4 + $0xa8] sm:$0xff] %v312
      %345 = vst [vmem:[#allocation4 + $0xb0] sm:$0xff] %v313
      %346 = vst [vmem:[#allocation4 + $0xb8] sm:$0xff] %v314
      %347 = vst [vmem:[#allocation4 + $0xc0] sm:$0xff] %v315
      %348 = vst [vmem:[#allocation4 + $0xc8] sm:$0xff] %v316
      %349 = vst [vmem:[#allocation4 + $0xd0] sm:$0xff] %v317
      %350 = vst [vmem:[#allocation4 + $0xd8] sm:$0xff] %v318
      %351 = vst [vmem:[#allocation4 + $0xe0] sm:$0xff] %v319
      %352 = vst [vmem:[#allocation4 + $0xe8] sm:$0xff] %v320
      %353 = vst [vmem:[#allocation4 + $0xf0] sm:$0xff] %v321
      %354 = vst [vmem:[#allocation4 + $0xf8] sm:$0xff] %v322
    $region17: #{tpu_custom_call.1} parent=1 // pred_fallthru
      _
    %v355 = vld [vmem:[#allocation5] sm:$0x3]
    %v356 = vld [vmem:[%s53] sm:$0x1]
    %v357 = vld [vmem:[#allocation3] sm:$0xff]
    %v358 = vld [vmem:[#allocation3 + $0x8] sm:$0xff]
    %v359 = vld [vmem:[#allocation3 + $0x10] sm:$0xff]
    %v360 = vld [vmem:[#allocation3 + $0x18] sm:$0xff]
    %v361 = vld [vmem:[#allocation3 + $0x20] sm:$0xff]
    %v362 = vld [vmem:[#allocation3 + $0x28] sm:$0xff]
    %v363 = vld [vmem:[#allocation3 + $0x30] sm:$0xff]
    %v364 = vld [vmem:[#allocation3 + $0x38] sm:$0xff]
    %v365 = vld [vmem:[#allocation3 + $0x40] sm:$0xff]
    %v366 = vld [vmem:[#allocation3 + $0x48] sm:$0xff]
    %v367 = vld [vmem:[#allocation3 + $0x50] sm:$0xff]
    %v368 = vld [vmem:[#allocation3 + $0x58] sm:$0xff]
    %v369 = vld [vmem:[#allocation3 + $0x60] sm:$0xff]
    %v370 = vld [vmem:[#allocation3 + $0x68] sm:$0xff]
    %v371 = vld [vmem:[#allocation3 + $0x70] sm:$0xff]
    %v372 = vld [vmem:[#allocation3 + $0x78] sm:$0xff]
    %v373 = vld [vmem:[#allocation3 + $0x80] sm:$0xff]
    %v374 = vld [vmem:[#allocation3 + $0x88] sm:$0xff]
    %v375 = vld [vmem:[#allocation3 + $0x90] sm:$0xff]
    %v376 = vld [vmem:[#allocation3 + $0x98] sm:$0xff]
    %v377 = vld [vmem:[#allocation3 + $0xa0] sm:$0xff]
    %v378 = vld [vmem:[#allocation3 + $0xa8] sm:$0xff]
    %v379 = vld [vmem:[#allocation3 + $0xb0] sm:$0xff]
    %v380 = vld [vmem:[#allocation3 + $0xb8] sm:$0xff]
    %v381 = vld [vmem:[#allocation3 + $0xc0] sm:$0xff]
    %v382 = vld [vmem:[#allocation3 + $0xc8] sm:$0xff]
    %v383 = vld [vmem:[#allocation3 + $0xd0] sm:$0xff]
    %v384 = vld [vmem:[#allocation3 + $0xd8] sm:$0xff]
    %v385 = vld [vmem:[#allocation3 + $0xe0] sm:$0xff]
    %v386 = vld [vmem:[#allocation3 + $0xe8] sm:$0xff]
    %v387 = vld [vmem:[#allocation3 + $0xf0] sm:$0xff]
    %v388 = vld [vmem:[#allocation3 + $0xf8] sm:$0xff]
    %v390 = vlaneseq
    %v391 = vshrl.u32 %v390, 7
    %v392 = vsub.s32 0, %v391
    %v393 = vrot.slane %v355, %v392
    %v394 = vlaneseq
    %v395 = vshrl.u32 %v394, 7
    %v396 = vsub.s32 1, %v395
    %v397 = vrot.slane %v355, %v396
    %400 = vmatprep.subr.mxu0 0.0
    %401 = vmatpush1.msra.mxu0 %v357
    %402 = vmatprep.subr.mxu0 0.0
    %403 = vmatpush1.msra.mxu0 %v358
    %404 = vmatprep.subr.mxu0 0.0
    %405 = vmatpush1.msra.mxu0 %v359
    %406 = vmatprep.subr.mxu0 0.0
    %407 = vmatpush1.msra.mxu0 %v360
    %408 = vmatprep.subr.mxu0 0.0
    %409 = vmatpush1.msra.mxu0 %v361
    %410 = vmatprep.subr.mxu0 0.0
    %411 = vmatpush1.msra.mxu0 %v362
    %412 = vmatprep.subr.mxu0 0.0
    %413 = vmatpush1.msra.mxu0 %v363
    %414 = vmatprep.subr.mxu0 0.0
    %415 = vmatpush1.msra.mxu0 %v364
    %416 = vmatprep.subr.mxu0 0.0
    %417 = vmatpush1.msra.mxu0 %v365
    %418 = vmatprep.subr.mxu0 0.0
    %419 = vmatpush1.msra.mxu0 %v366
    %420 = vmatprep.subr.mxu0 0.0
    %421 = vmatpush1.msra.mxu0 %v367
    %422 = vmatprep.subr.mxu0 0.0
    %423 = vmatpush1.msra.mxu0 %v368
    %424 = vmatprep.subr.mxu0 0.0
    %425 = vmatpush1.msra.mxu0 %v369
    %426 = vmatprep.subr.mxu0 0.0
    %427 = vmatpush1.msra.mxu0 %v370
    %428 = vmatprep.subr.mxu0 0.0
    %429 = vmatpush1.msra.mxu0 %v371
    %430 = vmatprep.subr.mxu0 0.0
    %431 = vmatpush1.msra.mxu0 %v372
    %432 = vmatprep.subr.mxu0 0.0
    %433 = vmatpush1.msra.mxu0 %v373
    %434 = vmatprep.subr.mxu0 0.0
    %435 = vmatpush1.msra.mxu0 %v374
    %436 = vmatprep.subr.mxu0 0.0
    %437 = vmatpush1.msra.mxu0 %v375
    %438 = vmatprep.subr.mxu0 0.0
    %439 = vmatpush1.msra.mxu0 %v376
    %440 = vmatprep.subr.mxu0 0.0
    %441 = vmatpush1.msra.mxu0 %v377
    %442 = vmatprep.subr.mxu0 0.0
    %443 = vmatpush1.msra.mxu0 %v378
    %444 = vmatprep.subr.mxu0 0.0
    %445 = vmatpush1.msra.mxu0 %v379
    %446 = vmatprep.subr.mxu0 0.0
    %447 = vmatpush1.msra.mxu0 %v380
    %448 = vmatprep.subr.mxu0 0.0
    %449 = vmatpush1.msra.mxu0 %v381
    %450 = vmatprep.subr.mxu0 0.0
    %451 = vmatpush1.msra.mxu0 %v382
    %452 = vmatprep.subr.mxu0 0.0
    %453 = vmatpush1.msra.mxu0 %v383
    %454 = vmatprep.subr.mxu0 0.0
    %455 = vmatpush1.msra.mxu0 %v384
    %456 = vmatprep.subr.mxu0 0.0
    %457 = vmatpush1.msra.mxu0 %v385
    %458 = vmatprep.subr.mxu0 0.0
    %459 = vmatpush1.msra.mxu0 %v386
    %460 = vmatprep.subr.mxu0 0.0
    %461 = vmatpush1.msra.mxu0 %v387
    %462 = vmatprep.subr.mxu0 0.0
    %463 = vmatpush1.msra.mxu0 %v388
    %464 = vmatprep.mubr.f32.mxu0 %v397
    %465 = vmatmul.mubr.f32.gmra.mrb[0].mxu0 %v393
    %v466 = vpop.f32.mrb[0].mxu0
    %v467 = vadd.f32 0.0, %v466
    %v468 = vpop.f32.mrb[0].mxu0
    %469 = vdwg.mxu0
    %v470 = vld [vmem:[#allocation4] sm:$0xff]
    %v471 = vld [vmem:[#allocation4 + $0x8] sm:$0xff]
    %v472 = vld [vmem:[#allocation4 + $0x10] sm:$0xff]
    %v473 = vld [vmem:[#allocation4 + $0x18] sm:$0xff]
    %v474 = vld [vmem:[#allocation4 + $0x20] sm:$0xff]
    %v475 = vld [vmem:[#allocation4 + $0x28] sm:$0xff]
    %v476 = vld [vmem:[#allocation4 + $0x30] sm:$0xff]
    %v477 = vld [vmem:[#allocation4 + $0x38] sm:$0xff]
    %v478 = vld [vmem:[#allocation4 + $0x40] sm:$0xff]
    %v479 = vld [vmem:[#allocation4 + $0x48] sm:$0xff]
    %v480 = vld [vmem:[#allocation4 + $0x50] sm:$0xff]
    %v481 = vld [vmem:[#allocation4 + $0x58] sm:$0xff]
    %v482 = vld [vmem:[#allocation4 + $0x60] sm:$0xff]
    %v483 = vld [vmem:[#allocation4 + $0x68] sm:$0xff]
    %v484 = vld [vmem:[#allocation4 + $0x70] sm:$0xff]
    %v485 = vld [vmem:[#allocation4 + $0x78] sm:$0xff]
    %v486 = vld [vmem:[#allocation4 + $0x80] sm:$0xff]
    %v487 = vld [vmem:[#allocation4 + $0x88] sm:$0xff]
    %v488 = vld [vmem:[#allocation4 + $0x90] sm:$0xff]
    %v489 = vld [vmem:[#allocation4 + $0x98] sm:$0xff]
    %v490 = vld [vmem:[#allocation4 + $0xa0] sm:$0xff]
    %v491 = vld [vmem:[#allocation4 + $0xa8] sm:$0xff]
    %v492 = vld [vmem:[#allocation4 + $0xb0] sm:$0xff]
    %v493 = vld [vmem:[#allocation4 + $0xb8] sm:$0xff]
    %v494 = vld [vmem:[#allocation4 + $0xc0] sm:$0xff]
    %v495 = vld [vmem:[#allocation4 + $0xc8] sm:$0xff]
    %v496 = vld [vmem:[#allocation4 + $0xd0] sm:$0xff]
    %v497 = vld [vmem:[#allocation4 + $0xd8] sm:$0xff]
    %v498 = vld [vmem:[#allocation4 + $0xe0] sm:$0xff]
    %v499 = vld [vmem:[#allocation4 + $0xe8] sm:$0xff]
    %v500 = vld [vmem:[#allocation4 + $0xf0] sm:$0xff]
    %v501 = vld [vmem:[#allocation4 + $0xf8] sm:$0xff]
    %502 = vmatprep.subr.mxu0 0.0
    %503 = vmatpush1.msra.mxu0 %v470
    %504 = vmatprep.subr.mxu0 0.0
    %505 = vmatpush1.msra.mxu0 %v471
    %506 = vmatprep.subr.mxu0 0.0
    %507 = vmatpush1.msra.mxu0 %v472
    %508 = vmatprep.subr.mxu0 0.0
    %509 = vmatpush1.msra.mxu0 %v473
    %510 = vmatprep.subr.mxu0 0.0
    %511 = vmatpush1.msra.mxu0 %v474
    %512 = vmatprep.subr.mxu0 0.0
    %513 = vmatpush1.msra.mxu0 %v475
    %514 = vmatprep.subr.mxu0 0.0
    %515 = vmatpush1.msra.mxu0 %v476
    %516 = vmatprep.subr.mxu0 0.0
    %517 = vmatpush1.msra.mxu0 %v477
    %518 = vmatprep.subr.mxu0 0.0
    %519 = vmatpush1.msra.mxu0 %v478
    %520 = vmatprep.subr.mxu0 0.0
    %521 = vmatpush1.msra.mxu0 %v479
    %522 = vmatprep.subr.mxu0 0.0
    %523 = vmatpush1.msra.mxu0 %v480
    %524 = vmatprep.subr.mxu0 0.0
    %525 = vmatpush1.msra.mxu0 %v481
    %526 = vmatprep.subr.mxu0 0.0
    %527 = vmatpush1.msra.mxu0 %v482
    %528 = vmatprep.subr.mxu0 0.0
    %529 = vmatpush1.msra.mxu0 %v483
    %530 = vmatprep.subr.mxu0 0.0
    %531 = vmatpush1.msra.mxu0 %v484
    %532 = vmatprep.subr.mxu0 0.0
    %533 = vmatpush1.msra.mxu0 %v485
    %534 = vmatprep.subr.mxu0 0.0
    %535 = vmatpush1.msra.mxu0 %v486
    %536 = vmatprep.subr.mxu0 0.0
    %537 = vmatpush1.msra.mxu0 %v487
    %538 = vmatprep.subr.mxu0 0.0
    %539 = vmatpush1.msra.mxu0 %v488
    %540 = vmatprep.subr.mxu0 0.0
    %541 = vmatpush1.msra.mxu0 %v489
    %542 = vmatprep.subr.mxu0 0.0
    %543 = vmatpush1.msra.mxu0 %v490
    %544 = vmatprep.subr.mxu0 0.0
    %545 = vmatpush1.msra.mxu0 %v491
    %546 = vmatprep.subr.mxu0 0.0
    %547 = vmatpush1.msra.mxu0 %v492
    %548 = vmatprep.subr.mxu0 0.0
    %549 = vmatpush1.msra.mxu0 %v493
    %550 = vmatprep.subr.mxu0 0.0
    %551 = vmatpush1.msra.mxu0 %v494
    %552 = vmatprep.subr.mxu0 0.0
    %553 = vmatpush1.msra.mxu0 %v495
    %554 = vmatprep.subr.mxu0 0.0
    %555 = vmatpush1.msra.mxu0 %v496
    %556 = vmatprep.subr.mxu0 0.0
    %557 = vmatpush1.msra.mxu0 %v497
    %558 = vmatprep.subr.mxu0 0.0
    %559 = vmatpush1.msra.mxu0 %v498
    %560 = vmatprep.subr.mxu0 0.0
    %561 = vmatpush1.msra.mxu0 %v499
    %562 = vmatprep.subr.mxu0 0.0
    %563 = vmatpush1.msra.mxu0 %v500
    %564 = vmatprep.subr.mxu0 0.0
    %565 = vmatpush1.msra.mxu0 %v501
    %566 = vmatprep.mubr.f32.mxu0 %v397
    %567 = vmatmul.mubr.f32.gmra.mrb[0].mxu0 %v393
    %v568 = vpop.f32.mrb[0].mxu0
    %v569 = vadd.f32 0.0, %v568
    %v570 = vpop.f32.mrb[0].mxu0
    %571 = vdwg.mxu0
    %v572 = vsub.f32 %v356, %v467
    %v573 = vsub.f32 0.0, %v569
    %v574 = vmul.f32 %v573, 1.442695
    %v575 = vpow.pop %v574
    %v576 = vmul.f32 %v572, %v572
    %v577 = vmul.f32 %v575, %v576
    %v578 = vadd.f32 %v569, %v577
    %v579 = vlaneseq
    %v580 = vshrl.u32 %v579, 7
    %s581 = sadd.s32 0, 0
    %v582 = vstv %s581
    %v583 = vadd.s32 %v580, %v582
    %vm584 = vcmp.lt.s32.totalorder %v583, 1
    %v585 = vsel %vm584, %v578, 0.0
    %v586 = vld [vmem:[#allocation2] sm:$0x1]
    %v587 = vadd.f32 %v585, 0.0
    %v588 = vadd.f32 %v586, %v587
    %589 = vst [vmem:[#allocation2] sm:$0x1] %v588
    // Predicated region
    $region18: #{tpu_custom_call.1} parent=1 // pred_check
      %p590 = pneg %p57
    $region19: #{tpu_custom_call.1} parent=1 // pred_check_branch
      %592 = sbr.rel (%p590) target = $region21
    $region20: #{tpu_custom_call.1} parent=1 // pred_region
      %v593 = vld [vmem:[#allocation2] sm:$0x1]
      %594 = vst [vmem:[#allocation8] sm:$0x1] %v593
    $region21: #{tpu_custom_call.1} parent=1 // pred_fallthru
      _
    // Predicated region
    $region22: #{tpu_custom_call.1} parent=1 // pred_check
      _
    $region23: #{tpu_custom_call.1} parent=1 // pred_check_branch
      %596 = sbr.rel (0) target = $region25
    $region24: #{tpu_custom_call.1} parent=1 // pred_region
      %s598 = ssub.s32 16, 16
      %599 = vsyncadd [#allocation7], %s598
      %s601 = sshll.u32 [#allocation8], 4
      %s602 = int_to_ptr.vmem [resolvable:$true] %s601
      %604 = dma.vmem_to_hbm [thread:$0]  %s602, 16, %s2, [#allocation7]
    $region25: #{tpu_custom_call.1} parent=1 // pred_fallthru
      _
    // Predicated region
    $region26: #{tpu_custom_call.1} parent=1 // pred_check
      _
    $region27: #{tpu_custom_call.1} parent=1 // pred_check_branch
      %606 = sbr.rel (0) target = $region29
    $region28: #{tpu_custom_call.1} parent=1 // pred_region
      %607 = dma.done [#allocation7], 16
    $region29: #{tpu_custom_call.1} parent=1 // pred_fallthru
      _
    %608 = vsyncpa [#allocation6], 1
    %609 = vsyncpa [#allocation7], 1

</llo_original>
